<compile_context>
chip_gen: v6e
topology: v6e:2x2x1
jax: 0.10.0
libtpu: 0.0.40
codegen_flags: <defaults>
</compile_context>

<pallas_src>
import functools

import numpy as np
import jax
import jax.numpy as jnp
from jax.experimental import pallas as pl
from jax.experimental.pallas import tpu as pltpu


_VMEM = pl.BlockSpec(memory_space=pltpu.MemorySpace.VMEM)
_SMEM = pl.BlockSpec(memory_space=pltpu.MemorySpace.SMEM)
_PARAMS = pltpu.CompilerParams(vmem_limit_bytes=32 * 1024 * 1024)


# --------------------------- generic one-shot MXU matmul ------------------------------
def _matmul_kernel(a_ref, b_ref, o_ref):
    o_ref[...] = jnp.dot(a_ref[...], b_ref[...], preferred_element_type=jnp.float32)


def _matmul(a, b):
    """(M,K)@(K,N) MXU matmul; whole operands resident in VMEM (small shapes here).
    # TODO(synk): tile with a grid + BlockSpecs for feature maps exceeding ~32 MiB (v7x)."""
    m, _ = a.shape
    n = b.shape[1]
    return pl.pallas_call(
        _matmul_kernel,
        out_shape=jax.ShapeDtypeStruct((m, n), jnp.float32),
        in_specs=[_VMEM, _VMEM],
        out_specs=_VMEM,
        compiler_params=_PARAMS,
    )(a, b)


def _apply_along_axis1(mat, x):
    """out[b,o,w,c] = sum_i mat[o,i] * x[b,i,w,c] -- batch folded into the lane dim."""
    bsz, i_dim, w_dim, c_dim = x.shape
    o_dim = mat.shape[0]
    xt = jnp.transpose(x, (1, 0, 2, 3)).reshape(i_dim, bsz * w_dim * c_dim)
    r = _matmul(mat, xt)                                   # (O, B*W*C) lane-dense
    return jnp.transpose(r.reshape(o_dim, bsz, w_dim, c_dim), (1, 0, 2, 3))


# --------------------------- kernel 1: 2x bilinear upsample ---------------------------
def _interp_matrix_1d(n_in, n_out):
    """1-D linear interpolation weights matching F.interpolate(bilinear, align_corners=True)."""
    if n_in == 1:
        return jnp.ones((n_out, 1), jnp.float32)
    src = np.arange(n_out, dtype=np.float64) * (n_in - 1) / (n_out - 1)
    lo = np.clip(np.floor(src).astype(np.int64), 0, n_in - 2)
    frac = src - lo
    w = np.zeros((n_out, n_in), np.float32)
    w[np.arange(n_out), lo] += (1.0 - frac)
    w[np.arange(n_out), lo + 1] += frac
    return jnp.asarray(w)


def bilinear_upsample_2x(feats):
    """feats: (B,Hin,Win,C) f32 -> (B,2Hin,2Win,C), bilinear align_corners=True.
    Separable: two small MXU matmuls (no kron-with-identity, no per-batch grid steps)."""
    _, h_in, w_in, _ = feats.shape
    wy = _interp_matrix_1d(h_in, 2 * h_in)                 # (Hout, Hin)
    wx = _interp_matrix_1d(w_in, 2 * w_in)                 # (Wout, Win)
    t = _apply_along_axis1(wy, feats)                      # (B, Hout, Win, C)
    t = jnp.transpose(t, (0, 2, 1, 3))                     # (B, Win, Hout, C)
    t = _apply_along_axis1(wx, t)                          # (B, Wout, Hout, C)
    return jnp.transpose(t, (0, 2, 1, 3))                  # (B, Hout, Wout, C)


# --------------------------- kernel 2: ROI mean pooling via SAT -----------------------
def integral_image(feats):
    """SAT[b,y,x,c] = sum_{y'<y, x'<x} feats[b,y',x',c]; shape (B,H+1,W+1,C)."""
    _, h, w, _ = feats.shape
    ly = jnp.asarray((np.arange(h + 1)[:, None] > np.arange(h)[None, :]).astype(np.float32))
    lx = jnp.asarray((np.arange(w + 1)[:, None] > np.arange(w)[None, :]).astype(np.float32))
    t = _apply_along_axis1(ly, feats)                      # (B, H+1, W, C)
    t = jnp.transpose(t, (0, 2, 1, 3))                     # (B, W, H+1, C)
    t = _apply_along_axis1(lx, t)                          # (B, W+1, H+1, C)
    return jnp.transpose(t, (0, 2, 1, 3))                  # (B, H+1, W+1, C)


def _roi_sat_kernel(boxes_ref, sat_ref, out_ref, *, hp1):
    # boxes_ref: SMEM (5*N,) int32, per-box [b, x1, y1, x2, y2] (x2/y2 exclusive)
    # sat_ref  : VMEM (B*(H+1), W+1, C) integral image
    # out_ref  : VMEM (N, C) box-mean features
    wp1 = sat_ref.shape[1]
    n = out_ref.shape[0]
    colv = jax.lax.broadcasted_iota(jnp.int32, (wp1, 1), 0)    # hoisted out of the loop

    def body(j, carry):
        b = boxes_ref[5 * j + 0]
        x1 = boxes_ref[5 * j + 1]
        y1 = boxes_ref[5 * j + 2]
        x2 = boxes_ref[5 * j + 3]
        y2 = boxes_ref[5 * j + 4]
        d = sat_ref[b * hp1 + y2] - sat_ref[b * hp1 + y1]        # (W+1, C)
        sel = (colv == x2).astype(jnp.float32) - (colv == x1).astype(jnp.float32)
        s = jnp.sum(d * sel, axis=0, keepdims=True)              # (1, C) box sum
        area = jnp.maximum((y2 - y1) * (x2 - x1), 1).astype(jnp.float32)
        out_ref[pl.ds(j, 1), :] = s / area
        return carry

    jax.lax.fori_loop(0, n, body, 0)


def roi_mean_pool(feats, boxes_np):
    """feats: (B,H,W,C) f32; boxes_np: (N,5) int32 [b,x1,y1,x2,y2] -> (N,C) box means."""
    bsz, h, w, c = feats.shape
    n = boxes_np.shape[0]
    n_pad = ((n + 7) // 8) * 8
    tab = np.zeros((n_pad, 5), np.int32)
    tab[:, 3] = 1                                # dummy in-bounds 1x1 boxes for padded rows
    tab[:, 4] = 1
    tab[:n] = boxes_np
    sat = integral_image(feats).reshape(bsz * (h + 1), w + 1, c)
    out = pl.pallas_call(
        functools.partial(_roi_sat_kernel, hp1=h + 1),
        out_shape=jax.ShapeDtypeStruct((n_pad, c), jnp.float32),
        in_specs=[_SMEM, _VMEM],
        out_specs=_VMEM,
        compiler_params=_PARAMS,
    )(jnp.asarray(tab.reshape(-1)), sat)
    return out[:n]


# --------------------------- kernel 3: fused relation MLP -----------------------------
def _mlp_kernel(x_ref, w1_ref, b1_ref, w2_ref, b2_ref, w3_ref, b3_ref, o_ref):
    h = jnp.dot(x_ref[...], w1_ref[...], preferred_element_type=jnp.float32) + b1_ref[...]
    h = jnp.maximum(h, 0.0)
    h = jnp.dot(h, w2_ref[...], preferred_element_type=jnp.float32) + b2_ref[...]
    h = jnp.maximum(h, 0.0)
    o_ref[...] = jnp.dot(h, w3_ref[...], preferred_element_type=jnp.float32) + b3_ref[...]


def mlp_forward(x, params, num_relations):
    """x: (P, 2C) pair features. One fused 3-layer call; 128-lane padded I/O."""
    w1, b1, w2, b2, w3, b3 = params
    p, d_in = x.shape
    p_pad = ((p + 7) // 8) * 8
    x_pad = jnp.zeros((p_pad, w1.shape[0]), jnp.float32).at[:p, :d_in].set(x)
    out = pl.pallas_call(
        _mlp_kernel,
        out_shape=jax.ShapeDtypeStruct((p_pad, w3.shape[1]), jnp.float32),
        in_specs=[_VMEM] * 7,
        out_specs=_VMEM,
        compiler_params=_PARAMS,
    )(x_pad, w1, b1, w2, b2, w3, b3)
    return out[:p, :num_relations]


# --------------------------- kernel 4: PostProcessHOI (the spec module) ---------------
def _postprocess_kernel(rel_ref, boxes_ref, scale_ref,
                        probs_ref, keep_ref, sboxes_ref, *, thr, nrel):
    logits = rel_ref[...]                                   # (M_pad, 128) lane-dense
    probs = 1.0 / (1.0 + jnp.exp(-logits))                  # sigmoid
    probs_ref[...] = probs
    valid = jax.lax.broadcasted_iota(jnp.int32, logits.shape, 1) < nrel
    hit = jnp.where(valid & (probs > thr), 1.0, 0.0)
    keep_ref[...] = jnp.max(hit, axis=1, keepdims=True)     # any(prob > threshold)
    sboxes_ref[...] = boxes_ref[...] * scale_ref[...]       # [sub_bbox|obj_bbox] * scales


class PostProcessHOIPallas:
    """JAX/Pallas port of PostProcessHOI.forward: one batched kernel call for the
    sigmoid / threshold / box-rescale math, host glue for the per-image dicts."""

    def __init__(self, relation_threshold=0.0, num_relations=117):
        self.relation_threshold = float(relation_threshold)
        self.num_relations = num_relations

    def forward(self, batch_hoi_results, targets):
        bsz = len(batch_hoi_results)
        rel_rows, box_rows, scale_rows, counts = [], [], [], []
        for b, image_results in enumerate(batch_hoi_results):
            orig_h, orig_w = [float(v) for v in targets[b]['orig_size']]
            cur_h, cur_w = [float(v) for v in targets[b]['size']]
            scale_w, scale_h = orig_w / cur_w, orig_h / cur_h
            counts.append(len(image_results))
            for hoi in image_results:
                rel_rows.append(np.asarray(hoi['relation_score'], np.float32))
                box_rows.append(np.asarray(list(hoi['subject_bbox']) + list(hoi['object_bbox']),
                                           np.float32))
                scale_rows.append(np.asarray([scale_w, scale_h, scale_w, scale_h] * 2, np.float32))

        total = len(rel_rows)
        if total == 0:
            return [{} for _ in range(bsz)]

        nrel = self.num_relations
        lane = ((nrel + 127) // 128) * 128
        m_pad = ((total + 7) // 8) * 8
        rel = np.zeros((m_pad, lane), np.float32)
        rel[:total, :nrel] = np.stack(rel_rows)
        boxes = np.zeros((m_pad, 8), np.float32)
        boxes[:total] = np.stack(box_rows)
        scalev = np.ones((m_pad, 8), np.float32)
        scalev[:total] = np.stack(scale_rows)

        probs, keep, sboxes = pl.pallas_call(
            functools.partial(_postprocess_kernel, thr=self.relation_threshold, nrel=nrel),
            out_shape=(jax.ShapeDtypeStruct((m_pad, lane), jnp.float32),
                       jax.ShapeDtypeStruct((m_pad, 1), jnp.float32),
                       jax.ShapeDtypeStruct((m_pad, 8), jnp.float32)),
            in_specs=[_VMEM, _VMEM, _VMEM],
            out_specs=(_VMEM, _VMEM, _VMEM),
            compiler_params=_PARAMS,
        )(jnp.asarray(rel), jnp.asarray(boxes), jnp.asarray(scalev))

        probs_np = np.asarray(jax.device_get(probs))[:total, :nrel]
        keep_np = np.asarray(jax.device_get(keep))[:total, 0] > 0.5
        sboxes_np = np.asarray(jax.device_get(sboxes))[:total]

        # host glue: rebuild per-image result dicts exactly like the reference
        processed_results = []
        g = 0
        for b, image_results in enumerate(batch_hoi_results):
            sub_labels, obj_labels = [], []
            sub_boxes, obj_boxes, verb_scores = [], [], []
            for k in range(counts[b]):
                row = g + k
                if not keep_np[row]:
                    continue
                hoi = image_results[k]
                sub_labels.append(int(hoi['subject_category']) - 1)
                obj_labels.append(int(hoi['object_category']) - 1)
                sub_boxes.append(sboxes_np[row, 0:4])
                obj_boxes.append(sboxes_np[row, 4:8])
                verb_scores.append(probs_np[row])
            g += counts[b]
            if sub_labels:
                n_keep = len(sub_labels)
                # TODO(synk): reference uses int64 labels/ids; JAX default is int32.
                image_dict = {
                    'labels': jnp.asarray(np.asarray(sub_labels + obj_labels, np.int32)),
                    'boxes': jnp.asarray(np.stack(sub_boxes + obj_boxes)),
                    'verb_scores': jnp.asarray(np.stack(verb_scores)),
                    'sub_ids': jnp.arange(n_keep, dtype=jnp.int32),
                    'obj_ids': jnp.arange(n_keep, dtype=jnp.int32) + n_keep,
                }
            else:
                image_dict = {}
            processed_results.append(image_dict)
        return processed_results


# --------------------------- HOI model (produces the hoi-result dicts) ----------------
class HOIModelPallas:
    """JAX/Pallas port of HOIModel_old.forward; emits per-image lists of HOI dicts that
    feed PostProcessHOIPallas (relation_score, categories, scores, bboxes)."""

    def __init__(self, backbone, num_objects=10, feature_dim=32,
                 person_category_id=1, patch_size=14, num_relations=117, key=None):
        self.backbone = backbone
        self.num_objects = num_objects
        self.feature_dim = feature_dim
        self.person_category_id = person_category_id
        self.patch_size = patch_size
        self.num_relations = num_relations
        ks = jax.random.split(key, 6)

        def linear_init(kw, kb, fan_in, fan_out):
            bound = 1.0 / np.sqrt(fan_in)
            w = jax.random.uniform(kw, (fan_in, fan_out), jnp.float32, -bound, bound)
            b = jax.random.uniform(kb, (1, fan_out), jnp.float32, -bound, bound)
            return w, b

        d_in = 2 * feature_dim
        d_in_pad = ((d_in + 127) // 128) * 128
        d_out_pad = ((num_relations + 127) // 128) * 128
        w1, self.b1 = linear_init(ks[0], ks[1], d_in, 512)
        self.w2, self.b2 = linear_init(ks[2], ks[3], 512, 256)
        w3, b3 = linear_init(ks[4], ks[5], 256, num_relations)
        # lane-pad first-layer input (2C -> 128) and last-layer output (117 -> 128)
        self.w1 = jnp.zeros((d_in_pad, 512), jnp.float32).at[:d_in].set(w1)
        self.w3 = jnp.zeros((256, d_out_pad), jnp.float32).at[:, :num_relations].set(w3)
        self.b3 = jnp.zeros((1, d_out_pad), jnp.float32).at[:, :num_relations].set(b3)

    def forward(self, images, mask, targets, detections_batch):
        feats, _, scales = self.backbone(images)             # (B, h0, w0, C) NHWC
        up = bilinear_upsample_2x(feats)                     # (B, 2h0, 2w0, C)

        # nearest-neighbour mask downsample (computed but unused, as in the reference)
        h_m, w_m = mask.shape[1], mask.shape[2]
        oh, ow = h_m // self.patch_size * 2, w_m // self.patch_size * 2
        _ = mask[:, (jnp.arange(oh) * h_m) // oh][:, :, (jnp.arange(ow) * w_m) // ow]

        bsz = images.shape[0]
        h, w = up.shape[1], up.shape[2]

        # host glue: bbox conversion / scaling / filtering
        det_rows, det_meta, per_image, had_dets = [], [], [], []
        for bi in range(bsz):
            h_img, w_img = targets[bi]['size']
            dets = detections_batch[bi]
            boxes = np.asarray(dets['boxes'])
            labels = np.asarray(dets['labels'])
            scores = np.asarray(dets['scores'])
            had_dets.append(len(boxes) > 0)
            rows_this = []
            for i in range(len(boxes)):
                cx, cy, bw, bh = [float(v) for v in boxes[i]]
                bbox = [(cx - bw / 2) * w_img, (cy - bh / 2) * h_img,
                        (cx + bw / 2) * w_img, (cy + bh / 2) * h_img]
                bs = [int(bbox[j] * scales[j % 2] / self.patch_size * 2) for j in range(4)]
                x1, y1, x2, y2 = bs
                if y2 <= y1 or x2 <= x1:
                    y2 = max(y2, y1 + 1)
                    x2 = max(x2, x1 + 1)
                if y2 > h or y1 < 0 or x1 < 0 or x2 > w:
                    continue
                rows_this.append(len(det_rows))
                det_rows.append((bi, x1, y1, x2, y2))
                det_meta.append((int(labels[i]), float(scores[i]), bbox))
            per_image.append(rows_this)

        det_feats = None
        if det_rows:
            det_feats = roi_mean_pool(up, np.asarray(det_rows, np.int32))   # (N, C)

        # human/object split, sort by score, top-k, all pairs (host glue)
        all_pair_idx, hoi_results = [], []
        pairs_per_image = [[] for _ in range(bsz)]
        for bi in range(bsz):
            if not had_dets[bi]:
                continue
            humans, objects = [], []
            for r in per_image[bi]:
                cat, sc, bbox = det_meta[r]
                (humans if cat == self.person_category_id else objects).append((r, sc, cat, bbox))
            humans.sort(key=lambda t: -t[1])
            objects.sort(key=lambda t: -t[1])
            if self.num_objects is not None:
                humans = humans[:self.num_objects]
                objects = objects[:self.num_objects]
            for hrow, hsc, hcat, hbox in humans:
                for orow, osc, ocat, obox in objects:
                    pairs_per_image[bi].append(len(hoi_results))
                    all_pair_idx.append((hrow, orow))
                    hoi_results.append({'subject_category': hcat, 'subject_score': hsc,
                                        'subject_bbox': hbox, 'object_category': ocat,
                                        'object_score': osc, 'object_bbox': obox})

        if not all_pair_idx:
            return [[] for _ in range(bsz)]

        hidx = jnp.asarray([p[0] for p in all_pair_idx], jnp.int32)
        oidx = jnp.asarray([p[1] for p in all_pair_idx], jnp.int32)
        pairs = jnp.concatenate([det_feats[hidx], det_feats[oidx]], axis=1)   # (P, 2C)

        relation_scores = mlp_forward(
            pairs, (self.w1, self.b1, self.w2, self.b2, self.w3, self.b3), self.num_relations)

        for i, hoi in enumerate(hoi_results):
            hoi['relation_score'] = relation_scores[i]

        return [[hoi_results[k] for k in pairs_per_image[bi]] for bi in range(bsz)]


# --------------------------- demo -------------------------------------------------------
if __name__ == "__main__":
    key = jax.random.PRNGKey(0)
    k_img, k_feat, k_param = jax.random.split(key, 3)

    B = 2
    patch_size = 14
    feature_dim = 32
    H_img = W_img = 112            # 8x8 patches -> 16x16 feature map after 2x upsample

    images = jax.random.normal(k_img, (B, 3, H_img, W_img), jnp.float32)  # NCHW (PyTorch)
    mask = jnp.zeros((B, H_img, W_img), dtype=jnp.bool_)
    targets = [{'size': (H_img, W_img), 'orig_size': (2 * H_img, 3 * W_img // 2)}
               for _ in range(B)]

    detections_batch = [
        {
            'boxes': np.array([[0.30, 0.30, 0.40, 0.40],
                               [0.70, 0.60, 0.30, 0.50],
                               [0.50, 0.50, 0.60, 0.60],
                               [0.25, 0.70, 0.30, 0.40]], np.float32),
            'labels': np.array([1, 3, 1, 5], np.int32),
            'scores': np.array([0.90, 0.80, 0.70, 0.95], np.float32),
        },
        {
            'boxes': np.array([[0.40, 0.35, 0.50, 0.45],
                               [0.60, 0.65, 0.35, 0.40],
                               [0.30, 0.60, 0.25, 0.35]], np.float32),
            'labels': np.array([1, 44, 18], np.int32),
            'scores': np.array([0.85, 0.65, 0.75], np.float32),
        },
    ]

    def backbone(imgs):
        # TODO(synk): the real denoising-ViT backbone is an external module; substitute a
        # deterministic synthetic patch-feature map of the right shape.
        b, _, hh, ww = imgs.shape
        h0, w0 = hh // patch_size, ww // patch_size
        feats = jax.random.normal(k_feat, (b, h0, w0, feature_dim), jnp.float32)
        return feats, None, (1.0, 1.0)

    model = HOIModelPallas(backbone, num_objects=10, feature_dim=feature_dim,
                           person_category_id=1, patch_size=patch_size, key=k_param)
    batch_hoi_results = model.forward(images, mask, targets, detections_batch)

    postprocess = PostProcessHOIPallas(relation_threshold=0.0)
    processed = postprocess.forward(batch_hoi_results, targets)

    assert len(processed) == B
    non_empty = [d for d in processed if d]
    assert non_empty, "expected at least one image with kept HOI pairs"
    for d in non_empty:
        vs = jax.block_until_ready(d['verb_scores'])
        n_keep = vs.shape[0]
        assert vs.shape[-1] == 117
        assert bool(jnp.all(jnp.isfinite(vs)))
        assert bool(jnp.all((vs >= 0.0) & (vs <= 1.0)))
        assert d['boxes'].shape == (2 * n_keep, 4)
        assert d['labels'].shape == (2 * n_keep,)
        assert int(d['sub_ids'][0]) == 0 and int(d['obj_ids'][0]) == n_keep
    print("KERNEL_OK")
</pallas_src>

<mosaic_0001>
module attributes {stable_mosaic.version = 11 : i64} {
  func.func @_matmul_kernel(%arg0: memref<16x8xf32, #tpu.memory_space<vmem>>, %arg1: memref<8x512xf32, #tpu.memory_space<vmem>>, %arg2: memref<16x512xf32, #tpu.memory_space<vmem>>) attributes {dimension_semantics = [], scalar_prefetch = 0 : i64, scratch_operands = 0 : i64, tpu.core_type = #tpu.core_type<tc>} {
    %c0 = arith.constant 0 : index
    %c0_0 = arith.constant 0 : index
    %0 = vector.load %arg0[%c0, %c0_0] : memref<16x8xf32, #tpu.memory_space<vmem>>, vector<16x8xf32>
    %c0_1 = arith.constant 0 : index
    %c0_2 = arith.constant 0 : index
    %1 = vector.load %arg1[%c0_1, %c0_2] : memref<8x512xf32, #tpu.memory_space<vmem>>, vector<8x512xf32>
    %cst = arith.constant dense<0.000000e+00> : vector<16x512xf32>
    %2 = tpu.matmul %0, %1, %cst {dimension_numbers = #tpu.dot_dimension_numbers<[1], [0], [0], [1], [0, 0, 1, 1], [], []>} : vector<16x8xf32>, vector<8x512xf32>, vector<16x512xf32> -> vector<16x512xf32>
    %c0_3 = arith.constant 0 : index
    %c0_4 = arith.constant 0 : index
    %3 = vector.load %arg2[%c0_3, %c0_4] : memref<16x512xf32, #tpu.memory_space<vmem>>, vector<16x512xf32>
    tpu.vector_store %arg2[%c0_3, %c0_4], %2 {strides = array<i32>} : memref<16x512xf32, #tpu.memory_space<vmem>>, vector<16x512xf32>,
    return
  }
}

</mosaic_0001>

<llo_original>
// kernel: tpu_custom_call.1
$region0: #{tpu_custom_call.1}
  #allocation0 [shape = 'u32[]', space=smem, size = 0x4, offset = 0x4, fixed_abs, tag = 'smem constant byte address 0x4 - core index']
  #allocation1 [shape = 'u32[144,128]{1,0:T(1,128)}', space=vmem, size = 0x12000, scoped, tag = 'internal scratch']
  %s0 = inlined_call_operand.vmem [shape: f32[16,8], index: 0, kind: input, shape index: {}]
  %s1 = inlined_call_operand.hbm [shape: f32[8,512], index: 1, kind: input, shape index: {}]
  %s2 = inlined_call_operand.hbm [shape: f32[16,512], index: 2, kind: output, shape index: {}]
  %s3 = sld [smem:[#allocation0]]
  $region22: #{tpu_custom_call.1} parent=0
    _
  %s5 = ssub.s32 1, %s3
  %s6 = scalar_select 0, %s5, %s3
  $region1: #{tpu_custom_call.1} parent=0
    #allocation2 [shape = 'u8[16384]{0}', space=vmem, size = 0x4000, scoped, tag = 'input window, operand 1, single buffered']
    #allocation3 [shape = 's32[1]{0}', space=sflag, size = 0x4, scoped, tag = 'scoped memory for tpu_custom_call.1']
    #allocation4 [shape = 's32[1]{0}', space=sflag, size = 0x4, scoped, tag = 'scoped memory for tpu_custom_call.1']
    #allocation5 [shape = 'u8[32768]{0}', space=vmem, size = 0x8000, scoped, tag = 'output window, operand 0, single buffered']
    %7 = vsyncpa [#allocation3], 0
    %8 = vsyncpa [#allocation4], 0
    // Predicated region
    $region2: #{tpu_custom_call.1} parent=1 // pred_check
      _
    $region3: #{tpu_custom_call.1} parent=1 // pred_check_branch
      %10 = sbr.rel (0) target = $region5
    $region4: #{tpu_custom_call.1} parent=1 // pred_region
      _
    $region5: #{tpu_custom_call.1} parent=1 // pred_fallthru
      _
    // Predicated region
    $region6: #{tpu_custom_call.1} parent=1 // pred_check
      _
    $region7: #{tpu_custom_call.1} parent=1 // pred_check_branch
      %12 = sbr.rel (0) target = $region9
    $region8: #{tpu_custom_call.1} parent=1 // pred_region
      %s14 = ssub.s32 512, 512
      %15 = vsyncadd [#allocation3], %s14
      %s17 = sshll.u32 [#allocation2], 4
      %s18 = int_to_ptr.vmem [resolvable:$true] %s17
      %20 = dma.hbm_to_vmem [thread:$0]  %s1, 512, %s18, [#allocation3]
    $region9: #{tpu_custom_call.1} parent=1 // pred_fallthru
      _
    // Predicated region
    $region10: #{tpu_custom_call.1} parent=1 // pred_check
      _
    $region11: #{tpu_custom_call.1} parent=1 // pred_check_branch
      %22 = sbr.rel (0) target = $region13
    $region12: #{tpu_custom_call.1} parent=1 // pred_region
      %23 = dma.done [#allocation3], 512
    $region13: #{tpu_custom_call.1} parent=1 // pred_fallthru
      _
    %v24 = vld [vmem:[%s0] sm:$0xff]
    %v25 = vld [vmem:[%s0 + $0x8] sm:$0xff]
    %v26 = vld [vmem:[#allocation2] sm:$0xff]
    %v27 = vld [vmem:[#allocation2 + $0x8] sm:$0xff]
    %v28 = vld [vmem:[#allocation2 + $0x10] sm:$0xff]
    %v29 = vld [vmem:[#allocation2 + $0x18] sm:$0xff]
    %vm30 = vcmask 64512
    %v32 = vsel %vm30, %v24, 0
    %v35 = vsel %vm30, %v25, 0
    %37 = vmatprep.subr.mxu0 0.0
    %38 = vmatpush1.msra.mxu0 0.0
    %39 = vmatprep.subr.mxu0 0.0
    %40 = vmatpush1.msra.mxu0 0.0
    %41 = vmatprep.subr.mxu0 0.0
    %42 = vmatpush1.msra.mxu0 0.0
    %43 = vmatprep.subr.mxu0 0.0
    %44 = vmatpush1.msra.mxu0 0.0
    %45 = vmatprep.subr.mxu0 0.0
    %46 = vmatpush1.msra.mxu0 0.0
    %47 = vmatprep.subr.mxu0 0.0
    %48 = vmatpush1.msra.mxu0 0.0
    %49 = vmatprep.subr.mxu0 0.0
    %50 = vmatpush1.msra.mxu0 0.0
    %51 = vmatprep.subr.mxu0 0.0
    %52 = vmatpush1.msra.mxu0 0.0
    %53 = vmatprep.subr.mxu0 0.0
    %54 = vmatpush1.msra.mxu0 0.0
    %55 = vmatprep.subr.mxu0 0.0
    %56 = vmatpush1.msra.mxu0 0.0
    %57 = vmatprep.subr.mxu0 0.0
    %58 = vmatpush1.msra.mxu0 0.0
    %59 = vmatprep.subr.mxu0 0.0
    %60 = vmatpush1.msra.mxu0 0.0
    %61 = vmatprep.subr.mxu0 0.0
    %62 = vmatpush1.msra.mxu0 0.0
    %63 = vmatprep.subr.mxu0 0.0
    %64 = vmatpush1.msra.mxu0 0.0
    %65 = vmatprep.subr.mxu0 0.0
    %66 = vmatpush1.msra.mxu0 0.0
    %67 = vmatprep.subr.mxu0 %v27
    %68 = vmatpush1.msra.mxu0 %v26
    %69 = vmatprep.subr.mxu0 0.0
    %70 = vmatpush2.msra.mxu0 0.0
    %71 = vmatprep.subr.mxu0 0.0
    %72 = vmatpush2.msra.mxu0 0.0
    %73 = vmatprep.subr.mxu0 0.0
    %74 = vmatpush2.msra.mxu0 0.0
    %75 = vmatprep.subr.mxu0 0.0
    %76 = vmatpush2.msra.mxu0 0.0
    %77 = vmatprep.subr.mxu0 0.0
    %78 = vmatpush2.msra.mxu0 0.0
    %79 = vmatprep.subr.mxu0 0.0
    %80 = vmatpush2.msra.mxu0 0.0
    %81 = vmatprep.subr.mxu0 0.0
    %82 = vmatpush2.msra.mxu0 0.0
    %83 = vmatprep.subr.mxu0 0.0
    %84 = vmatpush2.msra.mxu0 0.0
    %85 = vmatprep.subr.mxu0 0.0
    %86 = vmatpush2.msra.mxu0 0.0
    %87 = vmatprep.subr.mxu0 0.0
    %88 = vmatpush2.msra.mxu0 0.0
    %89 = vmatprep.subr.mxu0 0.0
    %90 = vmatpush2.msra.mxu0 0.0
    %91 = vmatprep.subr.mxu0 0.0
    %92 = vmatpush2.msra.mxu0 0.0
    %93 = vmatprep.subr.mxu0 0.0
    %94 = vmatpush2.msra.mxu0 0.0
    %95 = vmatprep.subr.mxu0 0.0
    %96 = vmatpush2.msra.mxu0 0.0
    %97 = vmatprep.subr.mxu0 0.0
    %98 = vmatpush2.msra.mxu0 0.0
    %99 = vmatprep.subr.mxu0 0.0
    %100 = vmatpush2.msra.mxu0 0.0
    %101 = vmatprep.mubr.f32.mxu0 0.0
    %102 = vmatmul.mubr.f32.gmra.mxu0 %v32
    %v103 = vpop.f32.mrf.mxu0
    %v104 = vadd.f32 0.0, %v103
    %v105 = vpop.f32.mrf.mxu0
    %v106 = vadd.f32 0.0, %v105
    %107 = vmatprep.mubr.f32.mxu0 0.0
    %108 = vmatmul.mubr.f32.gmra.mxu0 %v35
    %v109 = vpop.f32.mrf.mxu0
    %v110 = vadd.f32 0.0, %v109
    %v111 = vpop.f32.mrf.mxu0
    %v112 = vadd.f32 0.0, %v111
    %113 = vdwg.mxu0
    %114 = vmatprep.subr.mxu0 0.0
    %115 = vmatpush1.msra.mxu0 0.0
    %116 = vmatprep.subr.mxu0 0.0
    %117 = vmatpush1.msra.mxu0 0.0
    %118 = vmatprep.subr.mxu0 0.0
    %119 = vmatpush1.msra.mxu0 0.0
    %120 = vmatprep.subr.mxu0 0.0
    %121 = vmatpush1.msra.mxu0 0.0
    %122 = vmatprep.subr.mxu0 0.0
    %123 = vmatpush1.msra.mxu0 0.0
    %124 = vmatprep.subr.mxu0 0.0
    %125 = vmatpush1.msra.mxu0 0.0
    %126 = vmatprep.subr.mxu0 0.0
    %127 = vmatpush1.msra.mxu0 0.0
    %128 = vmatprep.subr.mxu0 0.0
    %129 = vmatpush1.msra.mxu0 0.0
    %130 = vmatprep.subr.mxu0 0.0
    %131 = vmatpush1.msra.mxu0 0.0
    %132 = vmatprep.subr.mxu0 0.0
    %133 = vmatpush1.msra.mxu0 0.0
    %134 = vmatprep.subr.mxu0 0.0
    %135 = vmatpush1.msra.mxu0 0.0
    %136 = vmatprep.subr.mxu0 0.0
    %137 = vmatpush1.msra.mxu0 0.0
    %138 = vmatprep.subr.mxu0 0.0
    %139 = vmatpush1.msra.mxu0 0.0
    %140 = vmatprep.subr.mxu0 0.0
    %141 = vmatpush1.msra.mxu0 0.0
    %142 = vmatprep.subr.mxu0 0.0
    %143 = vmatpush1.msra.mxu0 0.0
    %144 = vmatprep.subr.mxu0 %v29
    %145 = vmatpush1.msra.mxu0 %v28
    %146 = vmatprep.subr.mxu0 0.0
    %147 = vmatpush2.msra.mxu0 0.0
    %148 = vmatprep.subr.mxu0 0.0
    %149 = vmatpush2.msra.mxu0 0.0
    %150 = vmatprep.subr.mxu0 0.0
    %151 = vmatpush2.msra.mxu0 0.0
    %152 = vmatprep.subr.mxu0 0.0
    %153 = vmatpush2.msra.mxu0 0.0
    %154 = vmatprep.subr.mxu0 0.0
    %155 = vmatpush2.msra.mxu0 0.0
    %156 = vmatprep.subr.mxu0 0.0
    %157 = vmatpush2.msra.mxu0 0.0
    %158 = vmatprep.subr.mxu0 0.0
    %159 = vmatpush2.msra.mxu0 0.0
    %160 = vmatprep.subr.mxu0 0.0
    %161 = vmatpush2.msra.mxu0 0.0
    %162 = vmatprep.subr.mxu0 0.0
    %163 = vmatpush2.msra.mxu0 0.0
    %164 = vmatprep.subr.mxu0 0.0
    %165 = vmatpush2.msra.mxu0 0.0
    %166 = vmatprep.subr.mxu0 0.0
    %167 = vmatpush2.msra.mxu0 0.0
    %168 = vmatprep.subr.mxu0 0.0
    %169 = vmatpush2.msra.mxu0 0.0
    %170 = vmatprep.subr.mxu0 0.0
    %171 = vmatpush2.msra.mxu0 0.0
    %172 = vmatprep.subr.mxu0 0.0
    %173 = vmatpush2.msra.mxu0 0.0
    %174 = vmatprep.subr.mxu0 0.0
    %175 = vmatpush2.msra.mxu0 0.0
    %176 = vmatprep.subr.mxu0 0.0
    %177 = vmatpush2.msra.mxu0 0.0
    %178 = vmatprep.mubr.f32.mxu0 0.0
    %179 = vmatmul.mubr.f32.gmra.mxu0 %v32
    %v180 = vpop.f32.mrf.mxu0
    %v181 = vadd.f32 0.0, %v180
    %v182 = vpop.f32.mrf.mxu0
    %v183 = vadd.f32 0.0, %v182
    %184 = vmatprep.mubr.f32.mxu0 0.0
    %185 = vmatmul.mubr.f32.gmra.mxu0 %v35
    %v186 = vpop.f32.mrf.mxu0
    %v187 = vadd.f32 0.0, %v186
    %v188 = vpop.f32.mrf.mxu0
    %v189 = vadd.f32 0.0, %v188
    %190 = vdwg.mxu0
    %191 = vst [vmem:[#allocation5] sm:$0xff] %v104
    %192 = vst [vmem:[#allocation5 + $0x8] sm:$0xff] %v106
    %193 = vst [vmem:[#allocation5 + $0x10] sm:$0xff] %v181
    %194 = vst [vmem:[#allocation5 + $0x18] sm:$0xff] %v183
    %195 = vst [vmem:[#allocation5 + $0x20] sm:$0xff] %v110
    %196 = vst [vmem:[#allocation5 + $0x28] sm:$0xff] %v112
    %197 = vst [vmem:[#allocation5 + $0x30] sm:$0xff] %v187
    %198 = vst [vmem:[#allocation5 + $0x38] sm:$0xff] %v189
    // Predicated region
    $region14: #{tpu_custom_call.1} parent=1 // pred_check
      _
    $region15: #{tpu_custom_call.1} parent=1 // pred_check_branch
      %200 = sbr.rel (0) target = $region17
    $region16: #{tpu_custom_call.1} parent=1 // pred_region
      %s202 = ssub.s32 1024, 1024
      %203 = vsyncadd [#allocation4], %s202
      %s204 = sshll.u32 [#allocation5], 4
      %s205 = int_to_ptr.vmem [resolvable:$true] %s204
      %210 = dma.vmem_to_hbm [thread:$0]  %s205, 1024, %s2, [#allocation4], 512, 512, 32
    $region17: #{tpu_custom_call.1} parent=1 // pred_fallthru
      _
    // Predicated region
    $region18: #{tpu_custom_call.1} parent=1 // pred_check
      _
    $region19: #{tpu_custom_call.1} parent=1 // pred_check_branch
      %212 = sbr.rel (0) target = $region21
    $region20: #{tpu_custom_call.1} parent=1 // pred_region
      %213 = dma.done [#allocation4], 1024
    $region21: #{tpu_custom_call.1} parent=1 // pred_fallthru
      _
    %214 = vsyncpa [#allocation3], 1
    %215 = vsyncpa [#allocation4], 1

</llo_original>
